<compile_context>
chip_gen: v7x
topology: tpu7x:2x2x1
jax: 0.10.0
libtpu: 0.0.40
codegen_flags: <defaults>
</compile_context>

<pallas_src>
import functools

import jax
import jax.numpy as jnp
from jax.experimental import pallas as pl
from jax.experimental.pallas import tpu as pltpu


def _round_up(v, m):
    return (v + m - 1) // m * m


def _vmem_limit_bytes(needed):
    """Scoped-VMEM limit: generous on 128 MiB parts, <= 3/4 physical on v7x."""
    phys = 64 * 1024 * 1024
    try:
        phys = int(pltpu.get_tpu_info().vmem_capacity_bytes)
    except Exception:
        pass
    lo = 32 * 1024 * 1024
    hi = phys * 3 // 4
    return int(min(max(2 * needed, lo), hi))


def _gemm_stats_kernel(p_ref, w_ref, y_ref, stats_ref, *, M, TM):
    """Phase 1: one lane-dense MXU contraction per row tile + per-tile stats.

    p_ref:     (TM, K)     im2col patch tile (compute dtype)
    w_ref:     (K, OCp)    reshaped conv weights, OC zero-padded to OCp
    y_ref:     (TM, OCp)   un-normalized conv output tile (compute dtype)
    stats_ref: (1, 2, OCp) per-tile [sum, M2] over the tile's *valid* rows
    """
    acc = jnp.dot(p_ref[...], w_ref[...], preferred_element_type=jnp.float32)
    y_ref[...] = acc.astype(y_ref.dtype)

    # Padded rows of the last tile come from zero patches -> acc rows are
    # exactly 0; exclude them from M2 via the mask and from the count.
    rem = M - pl.program_id(0) * TM                      # valid rows remaining
    n = jnp.minimum(rem, TM).astype(jnp.float32)
    row = jax.lax.broadcasted_iota(jnp.int32, (TM, 1), 0)
    mask = (row < rem).astype(jnp.float32)               # (TM, 1)

    s = jnp.sum(acc, axis=0, keepdims=True)              # (1, OCp) tile sum
    d = (acc - s / n) * mask
    m2 = jnp.sum(d * d, axis=0, keepdims=True)           # (1, OCp) tile M2
    stats_ref[...] = jnp.concatenate([s, m2], axis=0)[None]


def _bn_apply_kernel(y_ref, scale_ref, shift_ref, o_ref):
    """Phase 2: lane-wide elementwise normalize  o = y * scale + shift."""
    y = y_ref[...].astype(jnp.float32)
    o_ref[...] = (y * scale_ref[...] + shift_ref[...]).astype(o_ref.dtype)


def conv2d_bn(x, weight, gamma, beta, *, padding=0, stride=1, eps=1e-3,
              compute_dtype=jnp.bfloat16, max_rows_per_tile=1024):
    """Forward of the PyTorch `Conv2d` module (conv without bias + BatchNorm2d).

    x: (N, C, H, W) f32 NCHW, weight: (OC, C, KH, KW), gamma/beta: (OC,)
    returns (N, OC, OH, OW) f32.
    """
    # TODO(synk): groups > 1 and dilation are not handled (module defaults).
    N, C, H, W = x.shape
    OC, Cin, KH, KW = weight.shape
    assert Cin == C
    OH = (H + 2 * padding - KH) // stride + 1
    OW = (W + 2 * padding - KW) // stride + 1
    M = N * OH * OW
    K = KH * KW * C
    OCp = _round_up(OC, 128)              # lane-dense / MXU-aligned output width

    # ---- row tiling over the flattened M axis (multiple of 32 rows) ----
    TM = max(32, min(_round_up(max_rows_per_tile, 32), _round_up(M, 32)))
    if _round_up(M, TM) == TM and M > 32:
        TM = _round_up(-(-M // 2), 32)    # force >= 2 grid steps
    Mp = _round_up(M, TM)
    num_tiles = Mp // TM

    # ---- thin wrapper-side im2col: lane-dense (M, KH*KW*C) patches ----
    # TODO(synk): for KH*KW*C >> 512 a streamed (no HBM im2col) path with an
    # extra OC grid axis would be preferable; channel counts here are small.
    xp = jnp.pad(x, ((0, 0), (0, 0), (padding, padding), (padding, padding)))
    x_nhwc = jnp.transpose(xp, (0, 2, 3, 1))                    # (N, Hp, Wp, C)
    h_span = (OH - 1) * stride + 1
    w_span = (OW - 1) * stride + 1
    taps = [x_nhwc[:, kh:kh + h_span:stride, kw:kw + w_span:stride, :]
            for kh in range(KH) for kw in range(KW)]            # (N,OH,OW,C) each
    patches = jnp.concatenate(taps, axis=-1).reshape(M, K)
    patches = jnp.pad(patches, ((0, Mp - M), (0, 0))).astype(compute_dtype)

    # (OC, C, KH, KW) -> (KH, KW, C, OC) -> (K, OCp); OC zero-padded.
    w2d = jnp.transpose(weight, (2, 3, 1, 0)).reshape(K, OC)
    w2d = jnp.pad(w2d, ((0, 0), (0, OCp - OC))).astype(compute_dtype)

    in_isz = jnp.dtype(compute_dtype).itemsize
    vmem_need = (2 * TM * _round_up(K, 128) * in_isz   # double-buffered patches
                 + 2 * TM * OCp * in_isz               # double-buffered y tile
                 + _round_up(K, 8) * OCp * in_isz      # resident weights
                 + TM * OCp * 4)                       # f32 accumulator
    cost1 = pl.CostEstimate(
        flops=2 * Mp * K * OCp, transcendentals=0,
        bytes_accessed=int(Mp * K * in_isz + K * OCp * in_isz
                           + Mp * OCp * in_isz + num_tiles * 2 * OCp * 4))

    y, stats = pl.pallas_call(
        functools.partial(_gemm_stats_kernel, M=M, TM=TM),
        out_shape=(jax.ShapeDtypeStruct((Mp, OCp), compute_dtype),
                   jax.ShapeDtypeStruct((num_tiles, 2, OCp), jnp.float32)),
        grid=(num_tiles,),
        in_specs=[pl.BlockSpec((TM, K), lambda i: (i, 0)),
                  pl.BlockSpec((K, OCp), lambda i: (0, 0))],
        out_specs=(pl.BlockSpec((TM, OCp), lambda i: (i, 0)),
                   pl.BlockSpec((1, 2, OCp), lambda i: (i, 0, 0))),
        compiler_params=pltpu.CompilerParams(
            dimension_semantics=("parallel",),
            vmem_limit_bytes=_vmem_limit_bytes(vmem_need)),
        cost_estimate=cost1,
    )(patches, w2d)

    # ---- Chan-style combination of per-tile (count, sum, M2) (tiny work) ----
    counts = jnp.minimum(M - jnp.arange(num_tiles) * TM, TM).astype(jnp.float32)

    def _chan(carry, xs):
        cnt, mean, m2 = carry
        n_t, s_t, m2_t = xs
        mean_t = s_t / n_t
        tot = cnt + n_t
        delta = mean_t - mean
        mean = mean + delta * (n_t / tot)
        m2 = m2 + m2_t + delta * delta * (cnt * n_t / tot)
        return (tot, mean, m2), None

    init = (jnp.float32(0.0),
            jnp.zeros((OCp,), jnp.float32), jnp.zeros((OCp,), jnp.float32))
    (_, mean, m2), _ = jax.lax.scan(_chan, init, (counts, stats[:, 0], stats[:, 1]))
    var = jnp.maximum(m2 / M, 0.0)
    inv = jax.lax.rsqrt(var + eps)
    g = jnp.pad(gamma.astype(jnp.float32), (0, OCp - OC))
    b = jnp.pad(beta.astype(jnp.float32), (0, OCp - OC))
    scale = g * inv
    shift = b - mean * scale

    # ---- Phase 2: lane-widened normalize (view y as (Mp/k, k*OCp)) ----
    k_wide = max(1, 512 // OCp)
    TMr = TM // k_wide                                   # multiple of 8 (TM % 32 == 0)
    y_wide = y.reshape(Mp // k_wide, k_wide * OCp)
    scale_w = jnp.tile(scale.reshape(1, OCp), (1, k_wide))
    shift_w = jnp.tile(shift.reshape(1, OCp), (1, k_wide))

    cost2 = pl.CostEstimate(
        flops=2 * Mp * OCp, transcendentals=0,
        bytes_accessed=int(Mp * OCp * (in_isz + 4) + 2 * k_wide * OCp * 4))

    out_wide = pl.pallas_call(
        _bn_apply_kernel,
        out_shape=jax.ShapeDtypeStruct((Mp // k_wide, k_wide * OCp), jnp.float32),
        grid=(num_tiles,),
        in_specs=[pl.BlockSpec((TMr, k_wide * OCp), lambda i: (i, 0)),
                  pl.BlockSpec((1, k_wide * OCp), lambda i: (0, 0)),
                  pl.BlockSpec((1, k_wide * OCp), lambda i: (0, 0))],
        out_specs=pl.BlockSpec((TMr, k_wide * OCp), lambda i: (i, 0)),
        compiler_params=pltpu.CompilerParams(
            dimension_semantics=("parallel",),
            vmem_limit_bytes=_vmem_limit_bytes(
                4 * TMr * k_wide * OCp * (in_isz + 4))),
        cost_estimate=cost2,
    )(y_wide, scale_w, shift_w)

    # strip row/channel padding, back to NCHW
    out = out_wide.reshape(Mp, OCp)[:M, :OC].reshape(N, OH, OW, OC)
    return jnp.transpose(out, (0, 3, 1, 2))


def _reference(x, weight, gamma, beta, *, padding, stride, eps):
    y = jax.lax.conv_general_dilated(
        x, weight,
        window_strides=(stride, stride),
        padding=[(padding, padding), (padding, padding)],
        dimension_numbers=("NCHW", "OIHW", "NCHW"),
    )
    mean = jnp.mean(y, axis=(0, 2, 3), keepdims=True)
    var = jnp.mean((y - mean) ** 2, axis=(0, 2, 3), keepdims=True)
    g = gamma.reshape(1, -1, 1, 1)
    b = beta.reshape(1, -1, 1, 1)
    return (y - mean) * jax.lax.rsqrt(var + eps) * g + b


if __name__ == "__main__":
    key = jax.random.PRNGKey(0)
    k_x, k_w, k_g, k_b = jax.random.split(key, 4)

    # small shapes consistent with the module: in_channels=4, out_channels=8,
    # kernel_size=3, padding=1, groups=1
    N, C, H, W = 2, 4, 16, 16
    OC, KH, KW = 8, 3, 3
    eps = 1e-3

    x = jax.random.normal(k_x, (N, C, H, W), dtype=jnp.float32)
    weight = jax.random.normal(k_w, (OC, C, KH, KW), dtype=jnp.float32) * 0.1
    gamma = 1.0 + 0.1 * jax.random.normal(k_g, (OC,), dtype=jnp.float32)
    beta = 0.1 * jax.random.normal(k_b, (OC,), dtype=jnp.float32)

    # --- stride 1, padding 1, f32 MXU path (multi-tile stats exercised) ---
    ref = _reference(x, weight, gamma, beta, padding=1, stride=1, eps=eps)
    out = conv2d_bn(x, weight, gamma, beta, padding=1, stride=1, eps=eps,
                    compute_dtype=jnp.float32, max_rows_per_tile=256)
    out = jax.block_until_ready(out)
    assert out.shape == (N, OC, H, W), out.shape
    assert jnp.allclose(out, ref, atol=1e-4, rtol=1e-4), float(
        jnp.max(jnp.abs(out - ref)))

    # --- stride 2 path, f32 ---
    ref_s2 = _reference(x, weight, gamma, beta, padding=1, stride=2, eps=eps)
    out_s2 = conv2d_bn(x, weight, gamma, beta, padding=1, stride=2, eps=eps,
                       compute_dtype=jnp.float32)
    out_s2 = jax.block_until_ready(out_s2)
    assert out_s2.shape == ref_s2.shape, out_s2.shape
    assert jnp.allclose(out_s2, ref_s2, atol=1e-4, rtol=1e-4), float(
        jnp.max(jnp.abs(out_s2 - ref_s2)))

    # --- default bf16 MXU-operand path (BN math stays f32) ---
    out_bf16 = conv2d_bn(x, weight, gamma, beta, padding=1, stride=1, eps=eps,
                         max_rows_per_tile=256)
    out_bf16 = jax.block_until_ready(out_bf16)
    assert out_bf16.shape == (N, OC, H, W), out_bf16.shape
    assert jnp.allclose(out_bf16, ref, atol=1e-1, rtol=1e-1), float(
        jnp.max(jnp.abs(out_bf16 - ref)))

    print("KERNEL_OK")
</pallas_src>

<mosaic_0001>
module attributes {stable_mosaic.version = 11 : i64} {
  func.func @_gemm_stats_kernel(%arg0: i32, %arg1: memref<256x36xf32, #tpu.memory_space<vmem>>, %arg2: memref<36x128xf32, #tpu.memory_space<vmem>>, %arg3: memref<256x128xf32, #tpu.memory_space<vmem>>, %arg4: memref<1x2x128xf32, #tpu.memory_space<vmem>>) attributes {dimension_semantics = [#tpu.dimension_semantics<parallel>], iteration_bounds = array<i64: 2>, scalar_prefetch = 0 : i64, scratch_operands = 0 : i64, tpu.core_type = #tpu.core_type<tc>, window_params = [{transform_indices = @transform_0, window_bounds = array<i64: 256, 36>}, {pipeline_mode = #tpu.pipeline_mode<synchronous>, transform_indices = @transform_1, window_bounds = array<i64: 36, 128>}, {transform_indices = @transform_2, window_bounds = array<i64: 256, 128>}, {transform_indices = @transform_3, window_bounds = array<i64: 1, 2, 128>}]} {
    %c0 = arith.constant 0 : index
    %c0_0 = arith.constant 0 : index
    %0 = vector.load %arg1[%c0, %c0_0] : memref<256x36xf32, #tpu.memory_space<vmem>>, vector<256x36xf32>
    %c0_1 = arith.constant 0 : index
    %c0_2 = arith.constant 0 : index
    %1 = vector.load %arg2[%c0_1, %c0_2] : memref<36x128xf32, #tpu.memory_space<vmem>>, vector<36x128xf32>
    %cst = arith.constant dense<0.000000e+00> : vector<256x128xf32>
    %2 = tpu.matmul %0, %1, %cst {dimension_numbers = #tpu.dot_dimension_numbers<[1], [0], [0], [1], [0, 0, 1, 1], [], []>} : vector<256x36xf32>, vector<36x128xf32>, vector<256x128xf32> -> vector<256x128xf32>
    %c0_3 = arith.constant 0 : index
    %c0_4 = arith.constant 0 : index
    %3 = vector.load %arg3[%c0_3, %c0_4] : memref<256x128xf32, #tpu.memory_space<vmem>>, vector<256x128xf32>
    tpu.vector_store %arg3[%c0_3, %c0_4], %2 {strides = array<i32>} : memref<256x128xf32, #tpu.memory_space<vmem>>, vector<256x128xf32>,
    %c256_i32 = arith.constant 256 : i32
    %4 = arith.muli %arg0, %c256_i32 : i32
    %c512_i32 = arith.constant 512 : i32
    %5 = arith.subi %c512_i32, %4 : i32
    %c256_i32_5 = arith.constant 256 : i32
    %6 = arith.minsi %5, %c256_i32_5 : i32
    %7 = arith.sitofp %6 : i32 to f32
    %8 = tpu.iota {dimensions = array<i32: 0>} : vector<256x1xi32>
    %9 = vector.broadcast %5 : i32 to vector<256x1xi32>
    %10 = arith.cmpi slt, %8, %9 : vector<256x1xi32>
    %11 = arith.extui %10 : vector<256x1xi1> to vector<256x1xi32>
    %12 = arith.sitofp %11 : vector<256x1xi32> to vector<256x1xf32>
    %cst_6 = arith.constant dense<0.000000e+00> : vector<128xf32>
    %13 = vector.multi_reduction <add>, %2, %cst_6 [0] : vector<256x128xf32> to vector<128xf32>
    %14 = vector.shape_cast %13 : vector<128xf32> to vector<1x128xf32>
    %15 = vector.broadcast %7 : f32 to vector<1x128xf32>
    %16 = arith.divf %14, %15 : vector<1x128xf32>
    %17 = vector.broadcast %16 : vector<1x128xf32> to vector<256x128xf32>
    %18 = arith.subf %2, %17 : vector<256x128xf32>
    %19 = vector.broadcast %12 : vector<256x1xf32> to vector<256x128xf32>
    %20 = arith.mulf %18, %19 : vector<256x128xf32>
    %21 = arith.mulf %20, %20 : vector<256x128xf32>
    %cst_7 = arith.constant dense<0.000000e+00> : vector<128xf32>
    %22 = vector.multi_reduction <add>, %21, %cst_7 [0] : vector<256x128xf32> to vector<128xf32>
    %23 = vector.shape_cast %22 : vector<128xf32> to vector<1x128xf32>
    %24 = tpu.concatenate %14, %23 in 0 : vector<1x128xf32>, vector<1x128xf32> -> vector<2x128xf32>
    %25 = vector.shape_cast %24 : vector<2x128xf32> to vector<1x2x128xf32>
    %c0_8 = arith.constant 0 : index
    %c0_9 = arith.constant 0 : index
    %c0_10 = arith.constant 0 : index
    %26 = vector.load %arg4[%c0_8, %c0_9, %c0_10] : memref<1x2x128xf32, #tpu.memory_space<vmem>>, vector<1x2x128xf32>
    tpu.vector_store %arg4[%c0_8, %c0_9, %c0_10], %25 {strides = array<i32>} : memref<1x2x128xf32, #tpu.memory_space<vmem>>, vector<1x2x128xf32>,
    return
  }
  func.func @transform_0(%arg0: i32) -> (i32, i32) {
    %c0_i32 = arith.constant 0 : i32
    %c0_i32_0 = arith.constant 0 : i32
    return %arg0, %c0_i32 : i32, i32
  }
  func.func @transform_1(%arg0: i32) -> (i32, i32) {
    %c0_i32 = arith.constant 0 : i32
    %c0_i32_0 = arith.constant 0 : i32
    %c0_i32_1 = arith.constant 0 : i32
    return %c0_i32, %c0_i32_0 : i32, i32
  }
  func.func @transform_2(%arg0: i32) -> (i32, i32) {
    %c0_i32 = arith.constant 0 : i32
    %c0_i32_0 = arith.constant 0 : i32
    return %arg0, %c0_i32 : i32, i32
  }
  func.func @transform_3(%arg0: i32) -> (i32, i32, i32) {
    %c0_i32 = arith.constant 0 : i32
    %c0_i32_0 = arith.constant 0 : i32
    %c0_i32_1 = arith.constant 0 : i32
    return %arg0, %c0_i32, %c0_i32_0 : i32, i32, i32
  }
}

</mosaic_0001>

<llo_original>
// kernel: tpu_custom_call.1
$region0: #{tpu_custom_call.1}
  #allocation0 [shape = 'u32[]', space=smem, size = 0x4, offset = 0x4, fixed_abs, tag = 'smem constant byte address 0x4 - core index']
  #allocation1 [shape = 'u32[144,128]{1,0:T(1,128)}', space=vmem, size = 0x12000, scoped, tag = 'internal scratch']
  %s0 = inlined_call_operand.vmem [shape: f32[512,36], index: 0, kind: input, shape index: {}]
  %s1 = inlined_call_operand.vmem [shape: f32[36,128], index: 1, kind: input, shape index: {}]
  %s2 = inlined_call_operand.hbm [shape: f32[512,128], index: 2, kind: output, shape index: {0}]
  %s3 = inlined_call_operand.hbm [shape: f32[2,2,128], index: 3, kind: output, shape index: {1}]
  %4 = xla_tuple %s2, %s3
  %s5 = sld [smem:[#allocation0]]
  $region49: #{tpu_custom_call.1} parent=0
    _
  %s7 = ssub.s32 1, %s5
  %s8 = scalar_select 0, %s7, %s5
  $region1: #{tpu_custom_call.1} parent=0
    #allocation2 [shape = 'u8[262144]{0}', space=vmem, size = 0x40000, scoped, tag = 'output window, operand 0']
    #allocation3 [shape = 's32[2]{0}', space=sflag, size = 0x8, scoped, tag = 'scoped memory for tpu_custom_call.1']
    #allocation4 [shape = 'u8[2048]{0}', space=vmem, size = 0x800, scoped, tag = 'output window, operand 1']
    #allocation5 [shape = 's32[2]{0}', space=sflag, size = 0x8, scoped, tag = 'scoped memory for tpu_custom_call.1']
    %9 = vsyncpa [#allocation3], 0
    %s10 = scalar_lea.sflag [#allocation3], 1
    %11 = vsyncpa %s10, 0
    %12 = vsyncpa [#allocation5], 0
    %s13 = scalar_lea.sflag [#allocation5], 1
    %14 = vsyncpa %s13, 0
    loop: start=0, step=1, limit=4
    $region2: #{tpu_custom_call.1} parent=1 // loop_pre_header
      _
    $region3: #{tpu_custom_call.1} parent=1 // loop_header
      %s16 = sphi 0, %s20
      %p17 = scmp.ge.s32.totalorder %s16, 4
      %s26 = sphi 0, %s28
      %s29 = sphi 0, %s26
      %s30 = sphi 0, %s29
      %s46 = sphi 0, %s30
      %s50 = sphi 0, %s50
      %s52 = sphi 0, %s50
      %s53 = sphi 0, %s52
      %s67 = sphi 0, %s53
      %s73 = sphi 0, %s75
      %s76 = sphi 0, %s73
      %s77 = sphi 0, %s76
      %s93 = sphi 0, %s77
      %s99 = sphi 0, %s101
      %s102 = sphi 0, %s99
      %s103 = sphi 0, %s102
      %s119 = sphi 0, %s103
    $region4: #{tpu_custom_call.1} parent=1 // loop_header_branch
      %19 = sbr.rel (%p17) target = $region8
    $region5: #{tpu_custom_call.1} parent=1 // loop_body
      %s21 = ssub.s32 %s16, 1
      %s22 = ssub.s32 %s16, 2
      %s23 = sadd.s32 %s16, 1
      %s24 = ssub.s32 %s16, %s23
      %p25 = scmp.eq.s32.totalorder %s24, 0
      %s27 = sadd.s32 %s26, 1
      %s28 = scalar_select %p25, %s26, %s27
      %p31 = pneg %p25
      %p32 = scmp.eq.s32.totalorder %s16, 1
      %p33 = por %p31, %p32
      %p34 = scmp.ne.s32.totalorder %s26, %s29
      %p35 = scmp.eq.s32.totalorder %s16, 0
      %p36 = por %p34, %p35
      %p37 = scmp.ne.s32.totalorder %s26, %s29
      %p38 = scmp.eq.s32.totalorder %s21, 1
      %p39 = por %p37, %p38
      %p40 = scmp.ne.s32.totalorder %s29, %s30
      %p41 = scmp.eq.s32.totalorder %s21, 0
      %p42 = por %p40, %p41
      %p43 = scmp.ne.s32.totalorder %s29, %s30
      %p44 = scmp.eq.s32.totalorder %s22, 1
      %p45 = por %p43, %p44
      %p47 = scmp.ne.s32.totalorder %s30, %s46
      %p48 = scmp.eq.s32.totalorder %s22, 0
      %p49 = por %p47, %p48
      %s51 = sadd.s32 %s50, 1
      %p54 = scmp.eq.s32.totalorder %s16, 1
      %p55 = scmp.ne.s32.totalorder %s50, %s52
      %p56 = scmp.eq.s32.totalorder %s16, 0
      %p57 = por %p55, %p56
      %p58 = scmp.ne.s32.totalorder %s50, %s52
      %p59 = scmp.eq.s32.totalorder %s21, 1
      %p60 = por %p58, %p59
      %p61 = scmp.ne.s32.totalorder %s52, %s53
      %p62 = scmp.eq.s32.totalorder %s21, 0
      %p63 = por %p61, %p62
      %p64 = scmp.ne.s32.totalorder %s52, %s53
      %p65 = scmp.eq.s32.totalorder %s22, 1
      %p66 = por %p64, %p65
      %p68 = scmp.ne.s32.totalorder %s53, %s67
      %p69 = scmp.eq.s32.totalorder %s22, 0
      %p70 = por %p68, %p69
      %s71 = ssub.s32 %s16, %s23
      %p72 = scmp.eq.s32.totalorder %s71, 0
      %s74 = sadd.s32 %s73, 1
      %s75 = scalar_select %p72, %s73, %s74
      %p78 = pneg %p72
      %p79 = scmp.eq.s32.totalorder %s16, 1
      %p80 = por %p78, %p79
      %p81 = scmp.ne.s32.totalorder %s73, %s76
      %p82 = scmp.eq.s32.totalorder %s16, 0
      %p83 = por %p81, %p82
      %p84 = scmp.ne.s32.totalorder %s73, %s76
      %p85 = scmp.eq.s32.totalorder %s21, 1
      %p86 = por %p84, %p85
      %p87 = scmp.ne.s32.totalorder %s76, %s77
      %p88 = scmp.eq.s32.totalorder %s21, 0
      %p89 = por %p87, %p88
      %p90 = scmp.ne.s32.totalorder %s76, %s77
      %p91 = scmp.eq.s32.totalorder %s22, 1
      %p92 = por %p90, %p91
      %p94 = scmp.ne.s32.totalorder %s77, %s93
      %p95 = scmp.eq.s32.totalorder %s22, 0
      %p96 = por %p94, %p95
      %s97 = ssub.s32 %s16, %s23
      %p98 = scmp.eq.s32.totalorder %s97, 0
      %s100 = sadd.s32 %s99, 1
      %s101 = scalar_select %p98, %s99, %s100
      %p104 = pneg %p98
      %p105 = scmp.eq.s32.totalorder %s16, 1
      %p106 = por %p104, %p105
      %p107 = scmp.ne.s32.totalorder %s99, %s102
      %p108 = scmp.eq.s32.totalorder %s16, 0
      %p109 = por %p107, %p108
      %p110 = scmp.ne.s32.totalorder %s99, %s102
      %p111 = scmp.eq.s32.totalorder %s21, 1
      %p112 = por %p110, %p111
      %p113 = scmp.ne.s32.totalorder %s102, %s103
      %p114 = scmp.eq.s32.totalorder %s21, 0
      %p115 = por %p113, %p114
      %p116 = scmp.ne.s32.totalorder %s102, %s103
      %p117 = scmp.eq.s32.totalorder %s22, 1
      %p118 = por %p116, %p117
      %p120 = scmp.ne.s32.totalorder %s103, %s119
      %p121 = scmp.eq.s32.totalorder %s22, 0
      %p122 = por %p120, %p121
      %p123 = scmp.le.s32.totalorder 1, %s16
      %p124 = scmp.lt.s32.totalorder %s16, 3
      %p125 = pnand %p123, %p124
      %p126 = pneg %p125
      // Predicated region
      $region9: #{tpu_custom_call.1} parent=5 // pred_check
        _
      $region10: #{tpu_custom_call.1} parent=5 // pred_check_branch
        %128 = sbr.rel (%p125) target = $region12
      $region11: #{tpu_custom_call.1} parent=5 // pred_region
        %s129 = ssub.s32 %s16, 1
        // Predicated region
        $region13: #{tpu_custom_call.1} parent=11 // pred_check
          %p130 = pneg %p63
        $region14: #{tpu_custom_call.1} parent=11 // pred_check_branch
          %132 = sbr.rel (%p130) target = $region16
        $region15: #{tpu_custom_call.1} parent=11 // pred_region
          _
        $region16: #{tpu_custom_call.1} parent=11 // pred_fallthru
          _
      $region12: #{tpu_custom_call.1} parent=5 // pred_fallthru
        _
      %p133 = scmp.lt.s32.totalorder %s16, 2
      // Predicated region
      $region17: #{tpu_custom_call.1} parent=5 // pred_check
        %p134 = pneg %p133
      $region18: #{tpu_custom_call.1} parent=5 // pred_check_branch
        %136 = sbr.rel (%p134) target = $region20
      $region19: #{tpu_custom_call.1} parent=5 // pred_region
        // Predicated region
        $region21: #{tpu_custom_call.1} parent=19 // pred_check
          %p137 = pneg %p36
        $region22: #{tpu_custom_call.1} parent=19 // pred_check_branch
          %139 = sbr.rel (%p137) target = $region24
        $region23: #{tpu_custom_call.1} parent=19 // pred_region
          %s140 = smul.u32 32, %s16
          %p141 = scmp.lt.s32.totalorder %s140, 63
          %s142 = scalar_select %p141, %s140, 63
          %s143 = smul.addr %s142, 8
          %s144 = scalar_lea.vmem %s0, %s143
          %s145 = smul.u32 32, %s16
        $region24: #{tpu_custom_call.1} parent=19 // pred_fallthru
          _
      $region20: #{tpu_custom_call.1} parent=5 // pred_fallthru
        _
      %p146 = scmp.le.s32.totalorder 1, %s16
      %p147 = scmp.lt.s32.totalorder %s16, 3
      %p148 = pnand %p146, %p147
      %p149 = pneg %p148
      // Predicated region
      $region25: #{tpu_custom_call.1} parent=5 // pred_check
        _
      $region26: #{tpu_custom_call.1} parent=5 // pred_check_branch
        %151 = sbr.rel (%p148) target = $region28
      $region27: #{tpu_custom_call.1} parent=5 // pred_region
        %s152 = ssub.s32 %s16, 1
        %s153 = smul.u32 32, %s21
        %p154 = scmp.lt.s32.totalorder %s153, 63
        %s155 = scalar_select %p154, %s153, 63
        %s156 = smul.addr %s155, 8
        %s157 = scalar_lea.vmem %s0, %s156
        %p158 = pneg %p42
        %p159 = pneg %p39
        %p160 = pneg %p63
        %p161 = pneg %p60
        %p162 = pneg %p89
        %p163 = pneg %p86
        %s164 = sand.u32 %s76, 1
        %s165 = scalar_lea.sflag [#allocation3], %s164
        %s166 = sand.u32 %s76, 1
        %s167 = smul.addr %s166, 256
        %s168 = scalar_lea.vmem [#allocation2], %s167
        %p169 = pneg %p115
        %p170 = pneg %p112
        %s171 = sand.u32 %s102, 1
        %s172 = scalar_lea.sflag [#allocation5], %s171
        %s173 = sand.u32 %s102, 1
        %s174 = smul.addr %s173, 2
        %s175 = scalar_lea.vmem [#allocation4], %s174
        %s176 = smul.u32 32, %s21
        %p177 = scmp.lt.s32.totalorder %s176, 63
        %s178 = scalar_select %p177, %s176, 63
        %s179 = smul.addr %s178, 8
        %s180 = scalar_lea.vmem %s0, %s179
        %s181 = smul.u32 32, %s21
        %s182 = smul.u32 32, %s21
        %v183 = vld [vmem:[%s180] sm:$0xff]
        %v184 = vld [vmem:[%s180 + $0x8] sm:$0xff]
        %v185 = vld [vmem:[%s180 + $0x10] sm:$0xff]
        %v186 = vld [vmem:[%s180 + $0x18] sm:$0xff]
        %v187 = vld [vmem:[%s180 + $0x20] sm:$0xff]
        %v188 = vld [vmem:[%s180 + $0x28] sm:$0xff]
        %v189 = vld [vmem:[%s180 + $0x30] sm:$0xff]
        %v190 = vld [vmem:[%s180 + $0x38] sm:$0xff]
        %v191 = vld [vmem:[%s180 + $0x40] sm:$0xff]
        %v192 = vld [vmem:[%s180 + $0x48] sm:$0xff]
        %v193 = vld [vmem:[%s180 + $0x50] sm:$0xff]
        %v194 = vld [vmem:[%s180 + $0x58] sm:$0xff]
        %v195 = vld [vmem:[%s180 + $0x60] sm:$0xff]
        %v196 = vld [vmem:[%s180 + $0x68] sm:$0xff]
        %v197 = vld [vmem:[%s180 + $0x70] sm:$0xff]
        %v198 = vld [vmem:[%s180 + $0x78] sm:$0xff]
        %v199 = vld [vmem:[%s180 + $0x80] sm:$0xff]
        %v200 = vld [vmem:[%s180 + $0x88] sm:$0xff]
        %v201 = vld [vmem:[%s180 + $0x90] sm:$0xff]
        %v202 = vld [vmem:[%s180 + $0x98] sm:$0xff]
        %v203 = vld [vmem:[%s180 + $0xa0] sm:$0xff]
        %v204 = vld [vmem:[%s180 + $0xa8] sm:$0xff]
        %v205 = vld [vmem:[%s180 + $0xb0] sm:$0xff]
        %v206 = vld [vmem:[%s180 + $0xb8] sm:$0xff]
        %v207 = vld [vmem:[%s180 + $0xc0] sm:$0xff]
        %v208 = vld [vmem:[%s180 + $0xc8] sm:$0xff]
        %v209 = vld [vmem:[%s180 + $0xd0] sm:$0xff]
        %v210 = vld [vmem:[%s180 + $0xd8] sm:$0xff]
        %v211 = vld [vmem:[%s180 + $0xe0] sm:$0xff]
        %v212 = vld [vmem:[%s180 + $0xe8] sm:$0xff]
        %v213 = vld [vmem:[%s180 + $0xf0] sm:$0xff]
        %v214 = vld [vmem:[%s180 + $0xf8] sm:$0xff]
        %v215 = vld [vmem:[%s1] sm:$0xff]
        %v216 = vld [vmem:[%s1 + $0x8] sm:$0xff]
        %v217 = vld [vmem:[%s1 + $0x10] sm:$0xff]
        %v218 = vld [vmem:[%s1 + $0x18] sm:$0xff]
        %v219 = vld [vmem:[%s1 + $0x20] sm:$0xf]
        %vm220 = vcmask 293888
        %v222 = vsel %vm220, %v183, 0
        %v225 = vsel %vm220, %v184, 0
        %v228 = vsel %vm220, %v185, 0
        %v231 = vsel %vm220, %v186, 0
        %v234 = vsel %vm220, %v187, 0
        %v237 = vsel %vm220, %v188, 0
        %v240 = vsel %vm220, %v189, 0
        %v243 = vsel %vm220, %v190, 0
        %v246 = vsel %vm220, %v191, 0
        %v249 = vsel %vm220, %v192, 0
        %v252 = vsel %vm220, %v193, 0
        %v255 = vsel %vm220, %v194, 0
        %v258 = vsel %vm220, %v195, 0
        %v261 = vsel %vm220, %v196, 0
        %v264 = vsel %vm220, %v197, 0
        %v267 = vsel %vm220, %v198, 0
        %v270 = vsel %vm220, %v199, 0
        %v273 = vsel %vm220, %v200, 0
        %v276 = vsel %vm220, %v201, 0
        %v279 = vsel %vm220, %v202, 0
        %v282 = vsel %vm220, %v203, 0
        %v285 = vsel %vm220, %v204, 0
        %v288 = vsel %vm220, %v205, 0
        %v291 = vsel %vm220, %v206, 0
        %v294 = vsel %vm220, %v207, 0
        %v297 = vsel %vm220, %v208, 0
        %v300 = vsel %vm220, %v209, 0
        %v303 = vsel %vm220, %v210, 0
        %v306 = vsel %vm220, %v211, 0
        %v309 = vsel %vm220, %v212, 0
        %v312 = vsel %vm220, %v213, 0
        %v315 = vsel %vm220, %v214, 0
        %vm317 = vcmask 1043456
        %v319 = vsel %vm317, %v219, 0
        %321 = vmatprep.subr.mxu0 0.0
        %322 = vmatpush1.msra.mxu0 %v215
        %323 = vmatprep.subr.mxu0 0.0
        %324 = vmatpush1.msra.mxu0 %v216
        %325 = vmatprep.subr.mxu0 0.0
        %326 = vmatpush1.msra.mxu0 %v217
        %327 = vmatprep.subr.mxu0 0.0
        %328 = vmatpush1.msra.mxu0 %v218
        %329 = vmatprep.subr.mxu0 0.0
        %330 = vmatpush1.msra.mxu0 %v319
        %331 = vmatprep.subr.mxu0 0.0
        %332 = vmatpush1.msra.mxu0 0.0
        %333 = vmatprep.subr.mxu0 0.0
        %334 = vmatpush1.msra.mxu0 0.0
        %335 = vmatprep.subr.mxu0 0.0
        %336 = vmatpush1.msra.mxu0 0.0
        %337 = vmatprep.subr.mxu0 0.0
        %338 = vmatpush1.msra.mxu0 0.0
        %339 = vmatprep.subr.mxu0 0.0
        %340 = vmatpush1.msra.mxu0 0.0
        %341 = vmatprep.subr.mxu0 0.0
        %342 = vmatpush1.msra.mxu0 0.0
        %343 = vmatprep.subr.mxu0 0.0
        %344 = vmatpush1.msra.mxu0 0.0
        %345 = vmatprep.subr.mxu0 0.0
        %346 = vmatpush1.msra.mxu0 0.0
        %347 = vmatprep.subr.mxu0 0.0
        %348 = vmatpush1.msra.mxu0 0.0
        %349 = vmatprep.subr.mxu0 0.0
        %350 = vmatpush1.msra.mxu0 0.0
        %351 = vmatprep.subr.mxu0 0.0
        %352 = vmatpush1.msra.mxu0 0.0
        %353 = vmatprep.subr.mxu0 0.0
        %354 = vmatpush1.msra.mxu0 0.0
        %355 = vmatprep.subr.mxu0 0.0
        %356 = vmatpush1.msra.mxu0 0.0
        %357 = vmatprep.subr.mxu0 0.0
        %358 = vmatpush1.msra.mxu0 0.0
        %359 = vmatprep.subr.mxu0 0.0
        %360 = vmatpush1.msra.mxu0 0.0
        %361 = vmatprep.subr.mxu0 0.0
        %362 = vmatpush1.msra.mxu0 0.0
        %363 = vmatprep.subr.mxu0 0.0
        %364 = vmatpush1.msra.mxu0 0.0
        %365 = vmatprep.subr.mxu0 0.0
        %366 = vmatpush1.msra.mxu0 0.0
        %367 = vmatprep.subr.mxu0 0.0
        %368 = vmatpush1.msra.mxu0 0.0
        %369 = vmatprep.subr.mxu0 0.0
        %370 = vmatpush1.msra.mxu0 0.0
        %371 = vmatprep.subr.mxu0 0.0
        %372 = vmatpush1.msra.mxu0 0.0
        %373 = vmatprep.subr.mxu0 0.0
        %374 = vmatpush1.msra.mxu0 0.0
        %375 = vmatprep.subr.mxu0 0.0
        %376 = vmatpush1.msra.mxu0 0.0
        %377 = vmatprep.subr.mxu0 0.0
        %378 = vmatpush1.msra.mxu0 0.0
        %379 = vmatprep.subr.mxu0 0.0
        %380 = vmatpush1.msra.mxu0 0.0
        %381 = vmatprep.subr.mxu0 0.0
        %382 = vmatpush1.msra.mxu0 0.0
        %383 = vmatprep.subr.mxu0 0.0
        %384 = vmatpush1.msra.mxu0 0.0
        %385 = vmatprep.mubr.f32.mxu0 0.0
        %386 = vmatmul.mubr.f32.gmra.mrb[0].mxu0 %v222
        %v387 = vpop.f32.mrb[0].mxu0
        %v388 = vadd.f32 0.0, %v387
        %v389 = vpop.f32.mrb[0].mxu0
        %390 = vmatprep.mubr.f32.mxu0 0.0
        %391 = vmatmul.mubr.f32.gmra.mrb[0].mxu0 %v225
        %v392 = vpop.f32.mrb[0].mxu0
        %v393 = vadd.f32 0.0, %v392
        %v394 = vpop.f32.mrb[0].mxu0
        %395 = vmatprep.mubr.f32.mxu0 0.0
        %396 = vmatmul.mubr.f32.gmra.mrb[0].mxu0 %v228
        %v397 = vpop.f32.mrb[0].mxu0
        %v398 = vadd.f32 0.0, %v397
        %v399 = vpop.f32.mrb[0].mxu0
        %400 = vmatprep.mubr.f32.mxu0 0.0
        %401 = vmatmul.mubr.f32.gmra.mrb[0].mxu0 %v231
        %v402 = vpop.f32.mrb[0].mxu0
        %v403 = vadd.f32 0.0, %v402
        %v404 = vpop.f32.mrb[0].mxu0
        %405 = vmatprep.mubr.f32.mxu0 0.0
        %406 = vmatmul.mubr.f32.gmra.mrb[0].mxu0 %v234
        %v407 = vpop.f32.mrb[0].mxu0
        %v408 = vadd.f32 0.0, %v407
        %v409 = vpop.f32.mrb[0].mxu0
        %410 = vmatprep.mubr.f32.mxu0 0.0
        %411 = vmatmul.mubr.f32.gmra.mrb[0].mxu0 %v237
        %v412 = vpop.f32.mrb[0].mxu0
        %v413 = vadd.f32 0.0, %v412
        %v414 = vpop.f32.mrb[0].mxu0
        %415 = vmatprep.mubr.f32.mxu0 0.0
        %416 = vmatmul.mubr.f32.gmra.mrb[0].mxu0 %v240
        %v417 = vpop.f32.mrb[0].mxu0
        %v418 = vadd.f32 0.0, %v417
        %v419 = vpop.f32.mrb[0].mxu0
        %420 = vmatprep.mubr.f32.mxu0 0.0
        %421 = vmatmul.mubr.f32.gmra.mrb[0].mxu0 %v243
        %v422 = vpop.f32.mrb[0].mxu0
        %v423 = vadd.f32 0.0, %v422
        %v424 = vpop.f32.mrb[0].mxu0
        %425 = vmatprep.mubr.f32.mxu0 0.0
        %426 = vmatmul.mubr.f32.gmra.mrb[0].mxu0 %v246
        %v427 = vpop.f32.mrb[0].mxu0
        %v428 = vadd.f32 0.0, %v427
        %v429 = vpop.f32.mrb[0].mxu0
        %430 = vmatprep.mubr.f32.mxu0 0.0
        %431 = vmatmul.mubr.f32.gmra.mrb[0].mxu0 %v249
        %v432 = vpop.f32.mrb[0].mxu0
        %v433 = vadd.f32 0.0, %v432
        %v434 = vpop.f32.mrb[0].mxu0
        %435 = vmatprep.mubr.f32.mxu0 0.0
        %436 = vmatmul.mubr.f32.gmra.mrb[0].mxu0 %v252
        %v437 = vpop.f32.mrb[0].mxu0
        %v438 = vadd.f32 0.0, %v437
        %v439 = vpop.f32.mrb[0].mxu0
        %440 = vmatprep.mubr.f32.mxu0 0.0
        %441 = vmatmul.mubr.f32.gmra.mrb[0].mxu0 %v255
        %v442 = vpop.f32.mrb[0].mxu0
        %v443 = vadd.f32 0.0, %v442
        %v444 = vpop.f32.mrb[0].mxu0
        %445 = vmatprep.mubr.f32.mxu0 0.0
        %446 = vmatmul.mubr.f32.gmra.mrb[0].mxu0 %v258
        %v447 = vpop.f32.mrb[0].mxu0
        %v448 = vadd.f32 0.0, %v447
        %v449 = vpop.f32.mrb[0].mxu0
        %450 = vmatprep.mubr.f32.mxu0 0.0
        %451 = vmatmul.mubr.f32.gmra.mrb[0].mxu0 %v261
        %v452 = vpop.f32.mrb[0].mxu0
        %v453 = vadd.f32 0.0, %v452
        %v454 = vpop.f32.mrb[0].mxu0
        %455 = vmatprep.mubr.f32.mxu0 0.0
        %456 = vmatmul.mubr.f32.gmra.mrb[0].mxu0 %v264
        %v457 = vpop.f32.mrb[0].mxu0
        %v458 = vadd.f32 0.0, %v457
        %v459 = vpop.f32.mrb[0].mxu0
        %460 = vmatprep.mubr.f32.mxu0 0.0
        %461 = vmatmul.mubr.f32.gmra.mrb[0].mxu0 %v267
        %v462 = vpop.f32.mrb[0].mxu0
        %v463 = vadd.f32 0.0, %v462
        %v464 = vpop.f32.mrb[0].mxu0
        %465 = vmatprep.mubr.f32.mxu0 0.0
        %466 = vmatmul.mubr.f32.gmra.mrb[0].mxu0 %v270
        %v467 = vpop.f32.mrb[0].mxu0
        %v468 = vadd.f32 0.0, %v467
        %v469 = vpop.f32.mrb[0].mxu0
        %470 = vmatprep.mubr.f32.mxu0 0.0
        %471 = vmatmul.mubr.f32.gmra.mrb[0].mxu0 %v273
        %v472 = vpop.f32.mrb[0].mxu0
        %v473 = vadd.f32 0.0, %v472
        %v474 = vpop.f32.mrb[0].mxu0
        %475 = vmatprep.mubr.f32.mxu0 0.0
        %476 = vmatmul.mubr.f32.gmra.mrb[0].mxu0 %v276
        %v477 = vpop.f32.mrb[0].mxu0
        %v478 = vadd.f32 0.0, %v477
        %v479 = vpop.f32.mrb[0].mxu0
        %480 = vmatprep.mubr.f32.mxu0 0.0
        %481 = vmatmul.mubr.f32.gmra.mrb[0].mxu0 %v279
        %v482 = vpop.f32.mrb[0].mxu0
        %v483 = vadd.f32 0.0, %v482
        %v484 = vpop.f32.mrb[0].mxu0
        %485 = vmatprep.mubr.f32.mxu0 0.0
        %486 = vmatmul.mubr.f32.gmra.mrb[0].mxu0 %v282
        %v487 = vpop.f32.mrb[0].mxu0
        %v488 = vadd.f32 0.0, %v487
        %v489 = vpop.f32.mrb[0].mxu0
        %490 = vmatprep.mubr.f32.mxu0 0.0
        %491 = vmatmul.mubr.f32.gmra.mrb[0].mxu0 %v285
        %v492 = vpop.f32.mrb[0].mxu0
        %v493 = vadd.f32 0.0, %v492
        %v494 = vpop.f32.mrb[0].mxu0
        %495 = vmatprep.mubr.f32.mxu0 0.0
        %496 = vmatmul.mubr.f32.gmra.mrb[0].mxu0 %v288
        %v497 = vpop.f32.mrb[0].mxu0
        %v498 = vadd.f32 0.0, %v497
        %v499 = vpop.f32.mrb[0].mxu0
        %500 = vmatprep.mubr.f32.mxu0 0.0
        %501 = vmatmul.mubr.f32.gmra.mrb[0].mxu0 %v291
        %v502 = vpop.f32.mrb[0].mxu0
        %v503 = vadd.f32 0.0, %v502
        %v504 = vpop.f32.mrb[0].mxu0
        %505 = vmatprep.mubr.f32.mxu0 0.0
        %506 = vmatmul.mubr.f32.gmra.mrb[0].mxu0 %v294
        %v507 = vpop.f32.mrb[0].mxu0
        %v508 = vadd.f32 0.0, %v507
        %v509 = vpop.f32.mrb[0].mxu0
        %510 = vmatprep.mubr.f32.mxu0 0.0
        %511 = vmatmul.mubr.f32.gmra.mrb[0].mxu0 %v297
        %v512 = vpop.f32.mrb[0].mxu0
        %v513 = vadd.f32 0.0, %v512
        %v514 = vpop.f32.mrb[0].mxu0
        %515 = vmatprep.mubr.f32.mxu0 0.0
        %516 = vmatmul.mubr.f32.gmra.mrb[0].mxu0 %v300
        %v517 = vpop.f32.mrb[0].mxu0
        %v518 = vadd.f32 0.0, %v517
        %v519 = vpop.f32.mrb[0].mxu0
        %520 = vmatprep.mubr.f32.mxu0 0.0
        %521 = vmatmul.mubr.f32.gmra.mrb[0].mxu0 %v303
        %v522 = vpop.f32.mrb[0].mxu0
        %v523 = vadd.f32 0.0, %v522
        %v524 = vpop.f32.mrb[0].mxu0
        %525 = vmatprep.mubr.f32.mxu0 0.0
        %526 = vmatmul.mubr.f32.gmra.mrb[0].mxu0 %v306
        %v527 = vpop.f32.mrb[0].mxu0
        %v528 = vadd.f32 0.0, %v527
        %v529 = vpop.f32.mrb[0].mxu0
        %530 = vmatprep.mubr.f32.mxu0 0.0
        %531 = vmatmul.mubr.f32.gmra.mrb[0].mxu0 %v309
        %v532 = vpop.f32.mrb[0].mxu0
        %v533 = vadd.f32 0.0, %v532
        %v534 = vpop.f32.mrb[0].mxu0
        %535 = vmatprep.mubr.f32.mxu0 0.0
        %536 = vmatmul.mubr.f32.gmra.mrb[0].mxu0 %v312
        %v537 = vpop.f32.mrb[0].mxu0
        %v538 = vadd.f32 0.0, %v537
        %v539 = vpop.f32.mrb[0].mxu0
        %540 = vmatprep.mubr.f32.mxu0 0.0
        %541 = vmatmul.mubr.f32.gmra.mrb[0].mxu0 %v315
        %v542 = vpop.f32.mrb[0].mxu0
        %v543 = vadd.f32 0.0, %v542
        %v544 = vpop.f32.mrb[0].mxu0
        %545 = vdwg.mxu0
        %546 = vst [vmem:[%s168] sm:$0xff] %v388
        %547 = vst [vmem:[%s168 + $0x8] sm:$0xff] %v393
        %548 = vst [vmem:[%s168 + $0x10] sm:$0xff] %v398
        %549 = vst [vmem:[%s168 + $0x18] sm:$0xff] %v403
        %550 = vst [vmem:[%s168 + $0x20] sm:$0xff] %v408
        %551 = vst [vmem:[%s168 + $0x28] sm:$0xff] %v413
        %552 = vst [vmem:[%s168 + $0x30] sm:$0xff] %v418
        %553 = vst [vmem:[%s168 + $0x38] sm:$0xff] %v423
        %554 = vst [vmem:[%s168 + $0x40] sm:$0xff] %v428
        %555 = vst [vmem:[%s168 + $0x48] sm:$0xff] %v433
        %556 = vst [vmem:[%s168 + $0x50] sm:$0xff] %v438
        %557 = vst [vmem:[%s168 + $0x58] sm:$0xff] %v443
        %558 = vst [vmem:[%s168 + $0x60] sm:$0xff] %v448
        %559 = vst [vmem:[%s168 + $0x68] sm:$0xff] %v453
        %560 = vst [vmem:[%s168 + $0x70] sm:$0xff] %v458
        %561 = vst [vmem:[%s168 + $0x78] sm:$0xff] %v463
        %562 = vst [vmem:[%s168 + $0x80] sm:$0xff] %v468
        %563 = vst [vmem:[%s168 + $0x88] sm:$0xff] %v473
        %564 = vst [vmem:[%s168 + $0x90] sm:$0xff] %v478
        %565 = vst [vmem:[%s168 + $0x98] sm:$0xff] %v483
        %566 = vst [vmem:[%s168 + $0xa0] sm:$0xff] %v488
        %567 = vst [vmem:[%s168 + $0xa8] sm:$0xff] %v493
        %568 = vst [vmem:[%s168 + $0xb0] sm:$0xff] %v498
        %569 = vst [vmem:[%s168 + $0xb8] sm:$0xff] %v503
        %570 = vst [vmem:[%s168 + $0xc0] sm:$0xff] %v508
        %571 = vst [vmem:[%s168 + $0xc8] sm:$0xff] %v513
        %572 = vst [vmem:[%s168 + $0xd0] sm:$0xff] %v518
        %573 = vst [vmem:[%s168 + $0xd8] sm:$0xff] %v523
        %574 = vst [vmem:[%s168 + $0xe0] sm:$0xff] %v528
        %575 = vst [vmem:[%s168 + $0xe8] sm:$0xff] %v533
        %576 = vst [vmem:[%s168 + $0xf0] sm:$0xff] %v538
        %577 = vst [vmem:[%s168 + $0xf8] sm:$0xff] %v543
        %s578 = smul.u32 %s21, 256
        %s579 = ssub.s32 512, %s578
        %p580 = scmp.lt.s32.totalorder %s579, 256
        %s581 = scalar_select %p580, %s579, 256
        %s582 = scvt.s32.f32 %s581
        %v583 = vlaneseq
        %v584 = vshrl.u32 %v583, 7
        %v585 = vadd.s32 %v584, 8
        %v586 = vadd.s32 %v584, 16
        %v587 = vadd.s32 %v584, 24
        %v588 = vadd.s32 %v584, 32
        %v589 = vadd.s32 %v584, 40
        %v590 = vadd.s32 %v584, 48
        %v591 = vadd.s32 %v584, 56
        %v592 = vadd.s32 %v584, 64
        %v593 = vadd.s32 %v584, 72
        %v594 = vadd.s32 %v584, 80
        %v595 = vadd.s32 %v584, 88
        %v596 = vadd.s32 %v584, 96
        %v597 = vadd.s32 %v584, 104
        %v598 = vadd.s32 %v584, 112
        %v599 = vadd.s32 %v584, 120
        %v600 = vadd.s32 %v584, 128
        %v601 = vadd.s32 %v584, 136
        %v602 = vadd.s32 %v584, 144
        %v603 = vadd.s32 %v584, 152
        %v604 = vadd.s32 %v584, 160
        %v605 = vadd.s32 %v584, 168
        %v606 = vadd.s32 %v584, 176
        %v607 = vadd.s32 %v584, 184
        %v608 = vadd.s32 %v584, 192
        %v609 = vadd.s32 %v584, 200
        %v610 = vadd.s32 %v584, 208
        %v611 = vadd.s32 %v584, 216
        %v612 = vadd.s32 %v584, 224
        %v613 = vadd.s32 %v584, 232
        %v614 = vadd.s32 %v584, 240
        %v615 = vadd.s32 %v584, 248
        %v616 = vstv %s579
        %vm617 = vcmp.lt.s32.totalorder %v584, %v616
        %vm618 = vcmp.lt.s32.totalorder %v585, %v616
        %vm619 = vcmp.lt.s32.totalorder %v586, %v616
        %vm620 = vcmp.lt.s32.totalorder %v587, %v616
        %vm621 = vcmp.lt.s32.totalorder %v588, %v616
        %vm622 = vcmp.lt.s32.totalorder %v589, %v616
        %vm623 = vcmp.lt.s32.totalorder %v590, %v616
        %vm624 = vcmp.lt.s32.totalorder %v591, %v616
        %vm625 = vcmp.lt.s32.totalorder %v592, %v616
        %vm626 = vcmp.lt.s32.totalorder %v593, %v616
        %vm627 = vcmp.lt.s32.totalorder %v594, %v616
        %vm628 = vcmp.lt.s32.totalorder %v595, %v616
        %vm629 = vcmp.lt.s32.totalorder %v596, %v616
        %vm630 = vcmp.lt.s32.totalorder %v597, %v616
        %vm631 = vcmp.lt.s32.totalorder %v598, %v616
        %vm632 = vcmp.lt.s32.totalorder %v599, %v616
        %vm633 = vcmp.lt.s32.totalorder %v600, %v616
        %vm634 = vcmp.lt.s32.totalorder %v601, %v616
        %vm635 = vcmp.lt.s32.totalorder %v602, %v616
        %vm636 = vcmp.lt.s32.totalorder %v603, %v616
        %vm637 = vcmp.lt.s32.totalorder %v604, %v616
        %vm638 = vcmp.lt.s32.totalorder %v605, %v616
        %vm639 = vcmp.lt.s32.totalorder %v606, %v616
        %vm640 = vcmp.lt.s32.totalorder %v607, %v616
        %vm641 = vcmp.lt.s32.totalorder %v608, %v616
        %vm642 = vcmp.lt.s32.totalorder %v609, %v616
        %vm643 = vcmp.lt.s32.totalorder %v610, %v616
        %vm644 = vcmp.lt.s32.totalorder %v611, %v616
        %vm645 = vcmp.lt.s32.totalorder %v612, %v616
        %vm646 = vcmp.lt.s32.totalorder %v613, %v616
        %vm647 = vcmp.lt.s32.totalorder %v614, %v616
        %vm648 = vcmp.lt.s32.totalorder %v615, %v616
        %v649 = vsel %vm617, 1, 0
        %v650 = vsel %vm618, 1, 0
        %v651 = vsel %vm619, 1, 0
        %v652 = vsel %vm620, 1, 0
        %v653 = vsel %vm621, 1, 0
        %v654 = vsel %vm622, 1, 0
        %v655 = vsel %vm623, 1, 0
        %v656 = vsel %vm624, 1, 0
        %v657 = vsel %vm625, 1, 0
        %v658 = vsel %vm626, 1, 0
        %v659 = vsel %vm627, 1, 0
        %v660 = vsel %vm628, 1, 0
        %v661 = vsel %vm629, 1, 0
        %v662 = vsel %vm630, 1, 0
        %v663 = vsel %vm631, 1, 0
        %v664 = vsel %vm632, 1, 0
        %v665 = vsel %vm633, 1, 0
        %v666 = vsel %vm634, 1, 0
        %v667 = vsel %vm635, 1, 0
        %v668 = vsel %vm636, 1, 0
        %v669 = vsel %vm637, 1, 0
        %v670 = vsel %vm638, 1, 0
        %v671 = vsel %vm639, 1, 0
        %v672 = vsel %vm640, 1, 0
        %v673 = vsel %vm641, 1, 0
        %v674 = vsel %vm642, 1, 0
        %v675 = vsel %vm643, 1, 0
        %v676 = vsel %vm644, 1, 0
        %v677 = vsel %vm645, 1, 0
        %v678 = vsel %vm646, 1, 0
        %v679 = vsel %vm647, 1, 0
        %v680 = vsel %vm648, 1, 0
        %v681 = vcvt.s32.f32 %v649
        %v682 = vcvt.s32.f32 %v650
        %v683 = vcvt.s32.f32 %v651
        %v684 = vcvt.s32.f32 %v652
        %v685 = vcvt.s32.f32 %v653
        %v686 = vcvt.s32.f32 %v654
        %v687 = vcvt.s32.f32 %v655
        %v688 = vcvt.s32.f32 %v656
        %v689 = vcvt.s32.f32 %v657
        %v690 = vcvt.s32.f32 %v658
        %v691 = vcvt.s32.f32 %v659
        %v692 = vcvt.s32.f32 %v660
        %v693 = vcvt.s32.f32 %v661
        %v694 = vcvt.s32.f32 %v662
        %v695 = vcvt.s32.f32 %v663
        %v696 = vcvt.s32.f32 %v664
        %v697 = vcvt.s32.f32 %v665
        %v698 = vcvt.s32.f32 %v666
        %v699 = vcvt.s32.f32 %v667
        %v700 = vcvt.s32.f32 %v668
        %v701 = vcvt.s32.f32 %v669
        %v702 = vcvt.s32.f32 %v670
        %v703 = vcvt.s32.f32 %v671
        %v704 = vcvt.s32.f32 %v672
        %v705 = vcvt.s32.f32 %v673
        %v706 = vcvt.s32.f32 %v674
        %v707 = vcvt.s32.f32 %v675
        %v708 = vcvt.s32.f32 %v676
        %v709 = vcvt.s32.f32 %v677
        %v710 = vcvt.s32.f32 %v678
        %v711 = vcvt.s32.f32 %v679
        %v712 = vcvt.s32.f32 %v680
        %v713 = vadd.f32 %v388, %v393
        %v714 = vadd.f32 %v713, %v398
        %v715 = vadd.f32 %v714, %v403
        %v716 = vadd.f32 %v715, %v408
        %v717 = vadd.f32 %v716, %v413
        %v718 = vadd.f32 %v717, %v418
        %v719 = vadd.f32 %v718, %v423
        %v720 = vadd.f32 %v719, %v428
        %v721 = vadd.f32 %v720, %v433
        %v722 = vadd.f32 %v721, %v438
        %v723 = vadd.f32 %v722, %v443
        %v724 = vadd.f32 %v723, %v448
        %v725 = vadd.f32 %v724, %v453
        %v726 = vadd.f32 %v725, %v458
        %v727 = vadd.f32 %v726, %v463
        %v728 = vadd.f32 %v727, %v468
        %v729 = vadd.f32 %v728, %v473
        %v730 = vadd.f32 %v729, %v478
        %v731 = vadd.f32 %v730, %v483
        %v732 = vadd.f32 %v731, %v488
        %v733 = vadd.f32 %v732, %v493
        %v734 = vadd.f32 %v733, %v498
        %v735 = vadd.f32 %v734, %v503
        %v736 = vadd.f32 %v735, %v508
        %v737 = vadd.f32 %v736, %v513
        %v738 = vadd.f32 %v737, %v518
        %v739 = vadd.f32 %v738, %v523
        %v740 = vadd.f32 %v739, %v528
        %v741 = vadd.f32 %v740, %v533
        %v742 = vadd.f32 %v741, %v538
        %v743 = vadd.f32 %v742, %v543
        %v744 = vrot.slane %v743, 4
        %v745 = vadd.f32 %v743, %v744
        %v746 = vrot.slane %v745, 2
        %v747 = vadd.f32 %v745, %v746
        %v748 = vrot.slane %v747, 1
        %v749 = vadd.f32 %v747, %v748
        %v750 = vstv %s582
        %v751 = vrcp.pop %v750
        %v752 = vmul.f32 %v749, %v751
        %v753 = vsub.f32 %v388, %v752
        %v754 = vsub.f32 %v393, %v752
        %v755 = vsub.f32 %v398, %v752
        %v756 = vsub.f32 %v403, %v752
        %v757 = vsub.f32 %v408, %v752
        %v758 = vsub.f32 %v413, %v752
        %v759 = vsub.f32 %v418, %v752
        %v760 = vsub.f32 %v423, %v752
        %v761 = vsub.f32 %v428, %v752
        %v762 = vsub.f32 %v433, %v752
        %v763 = vsub.f32 %v438, %v752
        %v764 = vsub.f32 %v443, %v752
        %v765 = vsub.f32 %v448, %v752
        %v766 = vsub.f32 %v453, %v752
        %v767 = vsub.f32 %v458, %v752
        %v768 = vsub.f32 %v463, %v752
        %v769 = vsub.f32 %v468, %v752
        %v770 = vsub.f32 %v473, %v752
        %v771 = vsub.f32 %v478, %v752
        %v772 = vsub.f32 %v483, %v752
        %v773 = vsub.f32 %v488, %v752
        %v774 = vsub.f32 %v493, %v752
        %v775 = vsub.f32 %v498, %v752
        %v776 = vsub.f32 %v503, %v752
        %v777 = vsub.f32 %v508, %v752
        %v778 = vsub.f32 %v513, %v752
        %v779 = vsub.f32 %v518, %v752
        %v780 = vsub.f32 %v523, %v752
        %v781 = vsub.f32 %v528, %v752
        %v782 = vsub.f32 %v533, %v752
        %v783 = vsub.f32 %v538, %v752
        %v784 = vsub.f32 %v543, %v752
        %v785 = vmul.f32 %v753, %v681
        %v786 = vmul.f32 %v754, %v682
        %v787 = vmul.f32 %v755, %v683
        %v788 = vmul.f32 %v756, %v684
        %v789 = vmul.f32 %v757, %v685
        %v790 = vmul.f32 %v758, %v686
        %v791 = vmul.f32 %v759, %v687
        %v792 = vmul.f32 %v760, %v688
        %v793 = vmul.f32 %v761, %v689
        %v794 = vmul.f32 %v762, %v690
        %v795 = vmul.f32 %v763, %v691
        %v796 = vmul.f32 %v764, %v692
        %v797 = vmul.f32 %v765, %v693
        %v798 = vmul.f32 %v766, %v694
        %v799 = vmul.f32 %v767, %v695
        %v800 = vmul.f32 %v768, %v696
        %v801 = vmul.f32 %v769, %v697
        %v802 = vmul.f32 %v770, %v698
        %v803 = vmul.f32 %v771, %v699
        %v804 = vmul.f32 %v772, %v700
        %v805 = vmul.f32 %v773, %v701
        %v806 = vmul.f32 %v774, %v702
        %v807 = vmul.f32 %v775, %v703
        %v808 = vmul.f32 %v776, %v704
        %v809 = vmul.f32 %v777, %v705
        %v810 = vmul.f32 %v778, %v706
        %v811 = vmul.f32 %v779, %v707
        %v812 = vmul.f32 %v780, %v708
        %v813 = vmul.f32 %v781, %v709
        %v814 = vmul.f32 %v782, %v710
        %v815 = vmul.f32 %v783, %v711
        %v816 = vmul.f32 %v784, %v712
        %v817 = vmul.f32 %v785, %v785
        %v818 = vmul.f32 %v786, %v786
        %v819 = vmul.f32 %v787, %v787
        %v820 = vmul.f32 %v788, %v788
        %v821 = vmul.f32 %v789, %v789
        %v822 = vmul.f32 %v790, %v790
        %v823 = vmul.f32 %v791, %v791
        %v824 = vmul.f32 %v792, %v792
        %v825 = vmul.f32 %v793, %v793
        %v826 = vmul.f32 %v794, %v794
        %v827 = vmul.f32 %v795, %v795
        %v828 = vmul.f32 %v796, %v796
        %v829 = vmul.f32 %v797, %v797
        %v830 = vmul.f32 %v798, %v798
        %v831 = vmul.f32 %v799, %v799
        %v832 = vmul.f32 %v800, %v800
        %v833 = vmul.f32 %v801, %v801
        %v834 = vmul.f32 %v802, %v802
        %v835 = vmul.f32 %v803, %v803
        %v836 = vmul.f32 %v804, %v804
        %v837 = vmul.f32 %v805, %v805
        %v838 = vmul.f32 %v806, %v806
        %v839 = vmul.f32 %v807, %v807
        %v840 = vmul.f32 %v808, %v808
        %v841 = vmul.f32 %v809, %v809
        %v842 = vmul.f32 %v810, %v810
        %v843 = vmul.f32 %v811, %v811
        %v844 = vmul.f32 %v812, %v812
        %v845 = vmul.f32 %v813, %v813
        %v846 = vmul.f32 %v814, %v814
        %v847 = vmul.f32 %v815, %v815
        %v848 = vmul.f32 %v816, %v816
        %v849 = vadd.f32 %v817, %v818
        %v850 = vadd.f32 %v849, %v819
        %v851 = vadd.f32 %v850, %v820
        %v852 = vadd.f32 %v851, %v821
        %v853 = vadd.f32 %v852, %v822
        %v854 = vadd.f32 %v853, %v823
        %v855 = vadd.f32 %v854, %v824
        %v856 = vadd.f32 %v855, %v825
        %v857 = vadd.f32 %v856, %v826
        %v858 = vadd.f32 %v857, %v827
        %v859 = vadd.f32 %v858, %v828
        %v860 = vadd.f32 %v859, %v829
        %v861 = vadd.f32 %v860, %v830
        %v862 = vadd.f32 %v861, %v831
        %v863 = vadd.f32 %v862, %v832
        %v864 = vadd.f32 %v863, %v833
        %v865 = vadd.f32 %v864, %v834
        %v866 = vadd.f32 %v865, %v835
        %v867 = vadd.f32 %v866, %v836
        %v868 = vadd.f32 %v867, %v837
        %v869 = vadd.f32 %v868, %v838
        %v870 = vadd.f32 %v869, %v839
        %v871 = vadd.f32 %v870, %v840
        %v872 = vadd.f32 %v871, %v841
        %v873 = vadd.f32 %v872, %v842
        %v874 = vadd.f32 %v873, %v843
        %v875 = vadd.f32 %v874, %v844
        %v876 = vadd.f32 %v875, %v845
        %v877 = vadd.f32 %v876, %v846
        %v878 = vadd.f32 %v877, %v847
        %v879 = vadd.f32 %v878, %v848
        %v880 = vrot.slane %v879, 4
        %v881 = vadd.f32 %v879, %v880
        %v882 = vrot.slane %v881, 2
        %v883 = vadd.f32 %v881, %v882
        %v884 = vrot.slane %v883, 1
        %v885 = vadd.f32 %v883, %v884
        %vm886 = vcmask 1040384
        %v887 = vsel %vm886, %v749, %v885
        %888 = vst [vmem:[%s175] sm:$0x3] %v887
        %s889 = sand.u32 %s76, 1
        %s890 = scalar_lea.sflag [#allocation3], %s889
        %s891 = sand.u32 %s76, 1
        %s892 = smul.addr %s891, 256
        %s893 = scalar_lea.vmem [#allocation2], %s892
        %s894 = sand.u32 %s102, 1
        %s895 = scalar_lea.sflag [#allocation5], %s894
        %s896 = sand.u32 %s102, 1
        %s897 = smul.addr %s896, 2
        %s898 = scalar_lea.vmem [#allocation4], %s897
        // Predicated region
        $region29: #{tpu_custom_call.1} parent=27 // pred_check
          %p899 = pneg %p86
        $region30: #{tpu_custom_call.1} parent=27 // pred_check_branch
          %901 = sbr.rel (%p899) target = $region32
        $region31: #{tpu_custom_call.1} parent=27 // pred_region
          %s902 = smul.u32 32, %s21
          %s904 = ssub.s32 4096, 4096
          %905 = vsyncadd %s890, %s904
          %s906 = smul.addr %s902, 128
          %s907 = scalar_lea.hbm %s2, %s906
          %s908 = sshll.u32 %s893, 4
          %s909 = int_to_ptr.vmem [resolvable:$true] %s908
          %914 = dma.vmem_to_hbm [thread:$0]  %s909, 4096, %s907, %s890, 128, 128, 8
        $region32: #{tpu_custom_call.1} parent=27 // pred_fallthru
          _
        // Predicated region
        $region33: #{tpu_custom_call.1} parent=27 // pred_check
          %p915 = pneg %p112
        $region34: #{tpu_custom_call.1} parent=27 // pred_check_branch
          %917 = sbr.rel (%p915) target = $region36
        $region35: #{tpu_custom_call.1} parent=27 // pred_region
          %s919 = ssub.s32 32, 32
          %920 = vsyncadd %s895, %s919
          %s921 = smul.addr %s21, 32
          %s922 = scalar_lea.hbm %s3, %s921
          %s924 = sshll.u32 %s898, 4
          %s925 = int_to_ptr.vmem [resolvable:$true] %s924
          %927 = dma.vmem_to_hbm [thread:$0]  %s925, 32, %s922, %s895
        $region36: #{tpu_custom_call.1} parent=27 // pred_fallthru
          _
      $region28: #{tpu_custom_call.1} parent=5 // pred_fallthru
        _
      %p928 = scmp.le.s32.totalorder 2, %s16
      // Predicated region
      $region37: #{tpu_custom_call.1} parent=5 // pred_check
        %p929 = pneg %p928
      $region38: #{tpu_custom_call.1} parent=5 // pred_check_branch
        %931 = sbr.rel (%p929) target = $region40
      $region39: #{tpu_custom_call.1} parent=5 // pred_region
        %s932 = ssub.s32 %s16, 2
        // Predicated region
        $region41: #{tpu_custom_call.1} parent=39 // pred_check
          %p933 = pneg %p92
        $region42: #{tpu_custom_call.1} parent=39 // pred_check_branch
          %935 = sbr.rel (%p933) target = $region44
        $region43: #{tpu_custom_call.1} parent=39 // pred_region
          %s936 = sand.u32 %s77, 1
          %s937 = scalar_lea.sflag [#allocation3], %s936
          %s938 = sand.u32 %s77, 1
          %s939 = smul.addr %s938, 256
          %s940 = scalar_lea.vmem [#allocation2], %s939
          %941 = dma.done %s937, 4096
        $region44: #{tpu_custom_call.1} parent=39 // pred_fallthru
          _
        // Predicated region
        $region45: #{tpu_custom_call.1} parent=39 // pred_check
          %p942 = pneg %p118
        $region46: #{tpu_custom_call.1} parent=39 // pred_check_branch
          %944 = sbr.rel (%p942) target = $region48
        $region47: #{tpu_custom_call.1} parent=39 // pred_region
          %s945 = sand.u32 %s103, 1
          %s946 = scalar_lea.sflag [#allocation5], %s945
          %s947 = sand.u32 %s103, 1
          %s948 = smul.addr %s947, 2
          %s949 = scalar_lea.vmem [#allocation4], %s948
          %950 = dma.done %s946, 32
        $region48: #{tpu_custom_call.1} parent=39 // pred_fallthru
          _
      $region40: #{tpu_custom_call.1} parent=5 // pred_fallthru
        _
    $region6: #{tpu_custom_call.1} parent=1 // loop_footer
      %s20 = sadd.s32 1, %s16
    $region7: #{tpu_custom_call.1} parent=1 // loop_footer_branch
      %15 = sbr.rel target = $region3
    $region8: #{tpu_custom_call.1} parent=1 // loop_exit
      _
    %951 = vsyncpa [#allocation3], 1
    %s952 = scalar_lea.sflag [#allocation3], 1
    %953 = vsyncpa %s952, 1
    %954 = vsyncpa [#allocation5], 1
    %s955 = scalar_lea.sflag [#allocation5], 1
    %956 = vsyncpa %s955, 1

</llo_original>
